<compile_context>
chip_gen: v7x
topology: tpu7x:2x2x1
jax: 0.10.0
libtpu: 0.0.40
codegen_flags: <defaults>
</compile_context>

<pallas_src>
import functools
import math

import jax
import jax.numpy as jnp
from jax.experimental import pallas as pl
from jax.experimental.pallas import tpu as pltpu


def _posenc_kernel(x_ref, out_ref, *, d_in, num_freqs, include_input):
    # x_ref:   (d_in,  tB)  -- batch on the lane axis
    # out_ref: (d_out, tB)
    x = x_ref[...].astype(jnp.float32)  # f32 compute; cast only at the store
    base = 0
    if include_input:
        out_ref[0:d_in, :] = x.astype(out_ref.dtype)
        base = d_in
    # freqs / phases depend only on (num_freqs, d_in), both static -> bake them in.
    # torch: freqs = repeat_interleave(2**linspace(0, F-1, F), 2); phases[1::2] = pi/2
    for j in range(2 * num_freqs):  # statically unrolled: 2F slabs of d_in rows each
        freq = 2.0 ** (j // 2)
        phase = 0.0 if (j % 2 == 0) else (math.pi * 0.5)
        enc = jnp.sin(phase + freq * x)  # lane-dense over tB lanes
        out_ref[base + j * d_in: base + (j + 1) * d_in, :] = enc.astype(out_ref.dtype)


def positional_encoding(x, num_freqs=6, include_input=True, block_cols=16384):
    """JAX/Pallas equivalent of PositionalEncoding.forward for x of shape (B, d_in)."""
    B, d_in = x.shape
    d_out = 2 * num_freqs * d_in + (d_in if include_input else 0)

    if B == 0:
        # torch's empty-batch special case: just return an empty (0, d_out) array.
        return jnp.zeros((0, d_out), x.dtype)

    # Lane tile: multiple of 128, capped at block_cols, but no bigger than needed.
    tB = max(128, min(block_cols, pl.cdiv(B, 128) * 128))
    tB = pl.cdiv(tB, 128) * 128
    B_pad = pl.cdiv(B, tB) * tB

    # Batch on the lane axis; pad ragged batches instead of asserting divisibility.
    # TODO(synk): if the consumer can take the (d_out, B) transposed layout directly,
    # drop the wrapper transposes and return out_t to save two HBM passes.
    xt = x.T  # (d_in, B)
    if B_pad != B:
        xt = jnp.pad(xt, ((0, 0), (0, B_pad - B)))

    kernel = functools.partial(
        _posenc_kernel, d_in=d_in, num_freqs=num_freqs, include_input=include_input
    )

    out_t = pl.pallas_call(
        kernel,
        out_shape=jax.ShapeDtypeStruct((d_out, B_pad), x.dtype),
        grid=(B_pad // tB,),
        in_specs=[pl.BlockSpec((d_in, tB), lambda i: (0, i))],
        out_specs=pl.BlockSpec((d_out, tB), lambda i: (0, i)),
        compiler_params=pltpu.CompilerParams(dimension_semantics=("parallel",)),
    )(xt)

    return out_t[:, :B].T  # (B, d_out)


def _reference(x, num_freqs=6, include_input=True):
    """Pure-JAX reference mirroring the torch forward exactly."""
    B, d_in = x.shape
    freqs = 2.0 ** jnp.linspace(0.0, num_freqs - 1, num_freqs)
    freqs_ri = jnp.repeat(freqs, 2).reshape(1, -1, 1)                       # (1, 2F, 1)
    phases = jnp.zeros((2 * num_freqs,)).at[1::2].set(jnp.pi * 0.5).reshape(1, -1, 1)
    embed = jnp.broadcast_to(x[:, None, :], (B, 2 * num_freqs, d_in))
    embed = jnp.sin(phases + embed * freqs_ri)
    embed = embed.reshape(B, -1)
    if include_input:
        embed = jnp.concatenate([x, embed], axis=-1)
    return embed


if __name__ == "__main__":
    key = jax.random.PRNGKey(0)
    B, d_in, num_freqs = 200, 3, 6   # ragged B (not a multiple of 128) on purpose
    x = jax.random.normal(key, (B, d_in), dtype=jnp.float32)

    out = positional_encoding(x, num_freqs=num_freqs, include_input=True)
    out = jax.block_until_ready(out)
    ref = _reference(x, num_freqs=num_freqs, include_input=True)
    assert out.shape == (B, 2 * num_freqs * d_in + d_in), out.shape
    assert jnp.allclose(out, ref, atol=1e-5, rtol=1e-5), "mismatch vs reference (include_input=True)"

    out2 = positional_encoding(x, num_freqs=num_freqs, include_input=False)
    out2 = jax.block_until_ready(out2)
    ref2 = _reference(x, num_freqs=num_freqs, include_input=False)
    assert out2.shape == (B, 2 * num_freqs * d_in), out2.shape
    assert jnp.allclose(out2, ref2, atol=1e-5, rtol=1e-5), "mismatch vs reference (include_input=False)"

    print("KERNEL_OK")
</pallas_src>

<mosaic_0001>
module attributes {stable_mosaic.version = 11 : i64} {
  func.func @_posenc_kernel(%arg0: i32, %arg1: memref<3x256xf32, #tpu.memory_space<vmem>>, %arg2: memref<39x256xf32, #tpu.memory_space<vmem>>) attributes {dimension_semantics = [#tpu.dimension_semantics<parallel>], iteration_bounds = array<i64: 1>, scalar_prefetch = 0 : i64, scratch_operands = 0 : i64, tpu.core_type = #tpu.core_type<tc>, window_params = [{transform_indices = @transform_0, window_bounds = array<i64: 3, 256>}, {transform_indices = @transform_1, window_bounds = array<i64: 39, 256>}]} {
    %c0 = arith.constant 0 : index
    %c0_0 = arith.constant 0 : index
    %0 = vector.load %arg1[%c0, %c0_0] : memref<3x256xf32, #tpu.memory_space<vmem>>, vector<3x256xf32>
    %c0_1 = arith.constant 0 : index
    %c0_2 = arith.constant 0 : index
    %1 = vector.load %arg2[%c0_1, %c0_2] : memref<39x256xf32, #tpu.memory_space<vmem>>, vector<3x256xf32>
    tpu.vector_store %arg2[%c0_1, %c0_2], %0 {strides = array<i32>} : memref<39x256xf32, #tpu.memory_space<vmem>>, vector<3x256xf32>,
    %cst = arith.constant 1.000000e+00 : f32
    %2 = vector.broadcast %cst : f32 to vector<3x256xf32>
    %3 = arith.mulf %2, %0 : vector<3x256xf32>
    %cst_3 = arith.constant 0.000000e+00 : f32
    %4 = vector.broadcast %cst_3 : f32 to vector<3x256xf32>
    %5 = arith.addf %4, %3 : vector<3x256xf32>
    %6 = math.sin %5 : vector<3x256xf32>
    %c3 = arith.constant 3 : index
    %c0_4 = arith.constant 0 : index
    %7 = vector.load %arg2[%c3, %c0_4] : memref<39x256xf32, #tpu.memory_space<vmem>>, vector<3x256xf32>
    tpu.vector_store %arg2[%c3, %c0_4], %6 {strides = array<i32>} : memref<39x256xf32, #tpu.memory_space<vmem>>, vector<3x256xf32>,
    %cst_5 = arith.constant 1.000000e+00 : f32
    %8 = vector.broadcast %cst_5 : f32 to vector<3x256xf32>
    %9 = arith.mulf %8, %0 : vector<3x256xf32>
    %cst_6 = arith.constant 1.57079637 : f32
    %10 = vector.broadcast %cst_6 : f32 to vector<3x256xf32>
    %11 = arith.addf %10, %9 : vector<3x256xf32>
    %12 = math.sin %11 : vector<3x256xf32>
    %c6 = arith.constant 6 : index
    %c0_7 = arith.constant 0 : index
    %13 = vector.load %arg2[%c6, %c0_7] : memref<39x256xf32, #tpu.memory_space<vmem>>, vector<3x256xf32>
    tpu.vector_store %arg2[%c6, %c0_7], %12 {strides = array<i32>} : memref<39x256xf32, #tpu.memory_space<vmem>>, vector<3x256xf32>,
    %cst_8 = arith.constant 2.000000e+00 : f32
    %14 = vector.broadcast %cst_8 : f32 to vector<3x256xf32>
    %15 = arith.mulf %14, %0 : vector<3x256xf32>
    %cst_9 = arith.constant 0.000000e+00 : f32
    %16 = vector.broadcast %cst_9 : f32 to vector<3x256xf32>
    %17 = arith.addf %16, %15 : vector<3x256xf32>
    %18 = math.sin %17 : vector<3x256xf32>
    %c9 = arith.constant 9 : index
    %c0_10 = arith.constant 0 : index
    %19 = vector.load %arg2[%c9, %c0_10] : memref<39x256xf32, #tpu.memory_space<vmem>>, vector<3x256xf32>
    tpu.vector_store %arg2[%c9, %c0_10], %18 {strides = array<i32>} : memref<39x256xf32, #tpu.memory_space<vmem>>, vector<3x256xf32>,
    %cst_11 = arith.constant 2.000000e+00 : f32
    %20 = vector.broadcast %cst_11 : f32 to vector<3x256xf32>
    %21 = arith.mulf %20, %0 : vector<3x256xf32>
    %cst_12 = arith.constant 1.57079637 : f32
    %22 = vector.broadcast %cst_12 : f32 to vector<3x256xf32>
    %23 = arith.addf %22, %21 : vector<3x256xf32>
    %24 = math.sin %23 : vector<3x256xf32>
    %c12 = arith.constant 12 : index
    %c0_13 = arith.constant 0 : index
    %25 = vector.load %arg2[%c12, %c0_13] : memref<39x256xf32, #tpu.memory_space<vmem>>, vector<3x256xf32>
    tpu.vector_store %arg2[%c12, %c0_13], %24 {strides = array<i32>} : memref<39x256xf32, #tpu.memory_space<vmem>>, vector<3x256xf32>,
    %cst_14 = arith.constant 4.000000e+00 : f32
    %26 = vector.broadcast %cst_14 : f32 to vector<3x256xf32>
    %27 = arith.mulf %26, %0 : vector<3x256xf32>
    %cst_15 = arith.constant 0.000000e+00 : f32
    %28 = vector.broadcast %cst_15 : f32 to vector<3x256xf32>
    %29 = arith.addf %28, %27 : vector<3x256xf32>
    %30 = math.sin %29 : vector<3x256xf32>
    %c15 = arith.constant 15 : index
    %c0_16 = arith.constant 0 : index
    %31 = vector.load %arg2[%c15, %c0_16] : memref<39x256xf32, #tpu.memory_space<vmem>>, vector<3x256xf32>
    tpu.vector_store %arg2[%c15, %c0_16], %30 {strides = array<i32>} : memref<39x256xf32, #tpu.memory_space<vmem>>, vector<3x256xf32>,
    %cst_17 = arith.constant 4.000000e+00 : f32
    %32 = vector.broadcast %cst_17 : f32 to vector<3x256xf32>
    %33 = arith.mulf %32, %0 : vector<3x256xf32>
    %cst_18 = arith.constant 1.57079637 : f32
    %34 = vector.broadcast %cst_18 : f32 to vector<3x256xf32>
    %35 = arith.addf %34, %33 : vector<3x256xf32>
    %36 = math.sin %35 : vector<3x256xf32>
    %c18 = arith.constant 18 : index
    %c0_19 = arith.constant 0 : index
    %37 = vector.load %arg2[%c18, %c0_19] : memref<39x256xf32, #tpu.memory_space<vmem>>, vector<3x256xf32>
    tpu.vector_store %arg2[%c18, %c0_19], %36 {strides = array<i32>} : memref<39x256xf32, #tpu.memory_space<vmem>>, vector<3x256xf32>,
    %cst_20 = arith.constant 8.000000e+00 : f32
    %38 = vector.broadcast %cst_20 : f32 to vector<3x256xf32>
    %39 = arith.mulf %38, %0 : vector<3x256xf32>
    %cst_21 = arith.constant 0.000000e+00 : f32
    %40 = vector.broadcast %cst_21 : f32 to vector<3x256xf32>
    %41 = arith.addf %40, %39 : vector<3x256xf32>
    %42 = math.sin %41 : vector<3x256xf32>
    %c21 = arith.constant 21 : index
    %c0_22 = arith.constant 0 : index
    %43 = vector.load %arg2[%c21, %c0_22] : memref<39x256xf32, #tpu.memory_space<vmem>>, vector<3x256xf32>
    tpu.vector_store %arg2[%c21, %c0_22], %42 {strides = array<i32>} : memref<39x256xf32, #tpu.memory_space<vmem>>, vector<3x256xf32>,
    %cst_23 = arith.constant 8.000000e+00 : f32
    %44 = vector.broadcast %cst_23 : f32 to vector<3x256xf32>
    %45 = arith.mulf %44, %0 : vector<3x256xf32>
    %cst_24 = arith.constant 1.57079637 : f32
    %46 = vector.broadcast %cst_24 : f32 to vector<3x256xf32>
    %47 = arith.addf %46, %45 : vector<3x256xf32>
    %48 = math.sin %47 : vector<3x256xf32>
    %c24 = arith.constant 24 : index
    %c0_25 = arith.constant 0 : index
    %49 = vector.load %arg2[%c24, %c0_25] : memref<39x256xf32, #tpu.memory_space<vmem>>, vector<3x256xf32>
    tpu.vector_store %arg2[%c24, %c0_25], %48 {strides = array<i32>} : memref<39x256xf32, #tpu.memory_space<vmem>>, vector<3x256xf32>,
    %cst_26 = arith.constant 1.600000e+01 : f32
    %50 = vector.broadcast %cst_26 : f32 to vector<3x256xf32>
    %51 = arith.mulf %50, %0 : vector<3x256xf32>
    %cst_27 = arith.constant 0.000000e+00 : f32
    %52 = vector.broadcast %cst_27 : f32 to vector<3x256xf32>
    %53 = arith.addf %52, %51 : vector<3x256xf32>
    %54 = math.sin %53 : vector<3x256xf32>
    %c27 = arith.constant 27 : index
    %c0_28 = arith.constant 0 : index
    %55 = vector.load %arg2[%c27, %c0_28] : memref<39x256xf32, #tpu.memory_space<vmem>>, vector<3x256xf32>
    tpu.vector_store %arg2[%c27, %c0_28], %54 {strides = array<i32>} : memref<39x256xf32, #tpu.memory_space<vmem>>, vector<3x256xf32>,
    %cst_29 = arith.constant 1.600000e+01 : f32
    %56 = vector.broadcast %cst_29 : f32 to vector<3x256xf32>
    %57 = arith.mulf %56, %0 : vector<3x256xf32>
    %cst_30 = arith.constant 1.57079637 : f32
    %58 = vector.broadcast %cst_30 : f32 to vector<3x256xf32>
    %59 = arith.addf %58, %57 : vector<3x256xf32>
    %60 = math.sin %59 : vector<3x256xf32>
    %c30 = arith.constant 30 : index
    %c0_31 = arith.constant 0 : index
    %61 = vector.load %arg2[%c30, %c0_31] : memref<39x256xf32, #tpu.memory_space<vmem>>, vector<3x256xf32>
    tpu.vector_store %arg2[%c30, %c0_31], %60 {strides = array<i32>} : memref<39x256xf32, #tpu.memory_space<vmem>>, vector<3x256xf32>,
    %cst_32 = arith.constant 3.200000e+01 : f32
    %62 = vector.broadcast %cst_32 : f32 to vector<3x256xf32>
    %63 = arith.mulf %62, %0 : vector<3x256xf32>
    %cst_33 = arith.constant 0.000000e+00 : f32
    %64 = vector.broadcast %cst_33 : f32 to vector<3x256xf32>
    %65 = arith.addf %64, %63 : vector<3x256xf32>
    %66 = math.sin %65 : vector<3x256xf32>
    %c33 = arith.constant 33 : index
    %c0_34 = arith.constant 0 : index
    %67 = vector.load %arg2[%c33, %c0_34] : memref<39x256xf32, #tpu.memory_space<vmem>>, vector<3x256xf32>
    tpu.vector_store %arg2[%c33, %c0_34], %66 {strides = array<i32>} : memref<39x256xf32, #tpu.memory_space<vmem>>, vector<3x256xf32>,
    %cst_35 = arith.constant 3.200000e+01 : f32
    %68 = vector.broadcast %cst_35 : f32 to vector<3x256xf32>
    %69 = arith.mulf %68, %0 : vector<3x256xf32>
    %cst_36 = arith.constant 1.57079637 : f32
    %70 = vector.broadcast %cst_36 : f32 to vector<3x256xf32>
    %71 = arith.addf %70, %69 : vector<3x256xf32>
    %72 = math.sin %71 : vector<3x256xf32>
    %c36 = arith.constant 36 : index
    %c0_37 = arith.constant 0 : index
    %73 = vector.load %arg2[%c36, %c0_37] : memref<39x256xf32, #tpu.memory_space<vmem>>, vector<3x256xf32>
    tpu.vector_store %arg2[%c36, %c0_37], %72 {strides = array<i32>} : memref<39x256xf32, #tpu.memory_space<vmem>>, vector<3x256xf32>,
    return
  }
  func.func @transform_0(%arg0: i32) -> (i32, i32) {
    %c0_i32 = arith.constant 0 : i32
    %c0_i32_0 = arith.constant 0 : i32
    return %c0_i32, %arg0 : i32, i32
  }
  func.func @transform_1(%arg0: i32) -> (i32, i32) {
    %c0_i32 = arith.constant 0 : i32
    %c0_i32_0 = arith.constant 0 : i32
    return %c0_i32, %arg0 : i32, i32
  }
}

</mosaic_0001>

<llo_original>
// kernel: tpu_custom_call.1
$region0: #{tpu_custom_call.1}
  #allocation0 [shape = 'u32[]', space=smem, size = 0x4, offset = 0x4, fixed_abs, tag = 'smem constant byte address 0x4 - core index']
  #allocation1 [shape = 'u32[144,128]{1,0:T(1,128)}', space=vmem, size = 0x12000, scoped, tag = 'internal scratch']
  %s0 = inlined_call_operand.hbm [shape: f32[3,256], index: 0, kind: input, shape index: {}]
  %s1 = inlined_call_operand.hbm [shape: f32[39,256], index: 1, kind: output, shape index: {}]
  %s2 = sld [smem:[#allocation0]]
  $region18: #{tpu_custom_call.1} parent=0
    _
  %s4 = ssub.s32 1, %s2
  %s5 = scalar_select 0, %s4, %s2
  $region1: #{tpu_custom_call.1} parent=0
    #allocation2 [shape = 'u8[4096]{0}', space=vmem, size = 0x1000, scoped, tag = 'input window, operand 0, single buffered']
    #allocation3 [shape = 's32[1]{0}', space=sflag, size = 0x4, scoped, tag = 'scoped memory for tpu_custom_call.1']
    #allocation4 [shape = 's32[1]{0}', space=sflag, size = 0x4, scoped, tag = 'scoped memory for tpu_custom_call.1']
    #allocation5 [shape = 'u8[40960]{0}', space=vmem, size = 0xa000, scoped, tag = 'output window, operand 0, single buffered']
    %6 = vsyncpa [#allocation3], 0
    %7 = vsyncpa [#allocation4], 0
    // Predicated region
    $region2: #{tpu_custom_call.1} parent=1 // pred_check
      _
    $region3: #{tpu_custom_call.1} parent=1 // pred_check_branch
      %9 = sbr.rel (0) target = $region5
    $region4: #{tpu_custom_call.1} parent=1 // pred_region
      %s11 = ssub.s32 128, 128
      %12 = vsyncadd [#allocation3], %s11
      %s14 = sshll.u32 [#allocation2], 4
      %s15 = int_to_ptr.vmem [resolvable:$true] %s14
      %17 = dma.hbm_to_vmem [thread:$0]  %s0, 128, %s15, [#allocation3]
    $region5: #{tpu_custom_call.1} parent=1 // pred_fallthru
      _
    // Predicated region
    $region6: #{tpu_custom_call.1} parent=1 // pred_check
      _
    $region7: #{tpu_custom_call.1} parent=1 // pred_check_branch
      %19 = sbr.rel (0) target = $region9
    $region8: #{tpu_custom_call.1} parent=1 // pred_region
      %20 = dma.done [#allocation3], 128
    $region9: #{tpu_custom_call.1} parent=1 // pred_fallthru
      _
    %v21 = vld [vmem:[#allocation2] sm:$0x77]
    %v23 = vcombine.high %v21, %v21
    %25 = vst [vmem:[#allocation5] sm:$0x7] %v21
    %26 = vst [vmem:[#allocation5 + $0x8] sm:$0x7] %v23
    %v27 = vadd.f32 %v21, 0.0
    %v28 = vand.u32 2147483647, %v27
    %vm29 = vcmp.le.f32.partialorder %v28, 0.7853982
    %vm30 = vcmp.lt.s32.totalorder %v27, 0
    %v31 = vand.u32 %v27, 2139095040
    %v32 = vshrl.u32 %v31, 23
    %v33 = vsub.s32 %v32, 127
    %v34 = vand.u32 2147483647, %v27
    %v35 = vand.u32 %v34, 8388607
    %v36 = vor.u32 %v35, 8388608
    %v37 = vsub.s32 0, %v36
    %v38 = vadd.s32 %v33, 1
    %vm39 = vcmp.gt.s32.totalorder %v38, 0
    %v40 = vsel %vm39, %v38, 0
    %v41 = vshrl.u32 %v40, 5
    %v42 = vand.u32 %v40, 31
    %v43 = vsub.s32 32, %v42
    %v44 = vshrl.u32 683565275, %v43
    %v45 = vshll.u32 683565275, %v42
    %v46 = vshrl.u32 2475754826, %v43
    %v47 = vor.u32 %v45, %v46
    %v48 = vshll.u32 2475754826, %v42
    %v49 = vshrl.u32 2131351028, %v43
    %v50 = vor.u32 %v48, %v49
    %v51 = vshll.u32 2131351028, %v42
    %v52 = vshrl.u32 2102212464, %v43
    %v53 = vor.u32 %v51, %v52
    %v54 = vshll.u32 2102212464, %v42
    %v55 = vshrl.u32 920167782, %v43
    %v56 = vor.u32 %v54, %v55
    %v57 = vshll.u32 920167782, %v42
    %v58 = vshrl.u32 1326507024, %v43
    %v59 = vor.u32 %v57, %v58
    %vm60 = vcmp.lt.s32.totalorder %v41, 1
    %vm61 = vcmp.lt.s32.totalorder %v41, 2
    %vm62 = vcmp.lt.s32.totalorder %v41, 3
    %vm63 = vcmp.lt.s32.totalorder %v41, 4
    %v64 = vsel %vm60, %v44, %v47
    %v65 = vsel %vm63, %v53, 2102212464
    %v66 = vsel %vm62, %v50, %v65
    %v67 = vsel %vm61, %v64, %v66
    %v68 = vsel %vm60, %v47, %v50
    %v69 = vsel %vm63, %v56, 920167782
    %v70 = vsel %vm62, %v53, %v69
    %v71 = vsel %vm61, %v68, %v70
    %v72 = vsel %vm60, %v50, %v53
    %v73 = vsel %vm63, %v59, 1326507024
    %v74 = vsel %vm62, %v56, %v73
    %v75 = vsel %vm61, %v72, %v74
    %v76 = vshll.u32 %v36, 8
    %v77 = vmul.u32.u64.compose %v76, %v75
    %v78 = vextract.low.u32 %v77
    %v79 = vextract.high.u32 %v77
    %v80 = vmul.u32.u64.compose %v76, %v71
    %v81 = vextract.low.u32 %v80
    %v82 = vextract.high.u32 %v80
    %v83 = vmul.u32 %v76, %v67
    %v84 = vadd.s32 %v79, %v81
    %vm85 = vc.u32 %v79, %v81
    %v86 = vadd.s32 %v82, 1
    %v87 = vsel %vm85, %v86, %v82
    %v88 = vadd.s32 %v83, %v87
    %v89 = vadd.s32 %v88, 536870912
    %v90 = vshrl.u32 %v89, 30
    %v91 = vshll.u32 %v90, 30
    %v92 = vsub.s32 %v88, %v91
    %vm93 = vcmp.lt.s32.totalorder %v92, 0
    %v94 = vsub.s32 0, %v92
    %v95 = vsel %vm93, %v94, %v92
    %v96 = vclz %v95
    %v97 = vsub.s32 %v96, 2
    %vm98 = vcmp.gt.s32.totalorder 0, %v97
    %v99 = vsel %vm98, 0, %v97
    %v100 = vsub.s32 32, %v99
    %v101 = vshll.u32 %v92, %v99
    %v102 = vshrl.u32 %v84, %v100
    %v103 = vor.u32 %v101, %v102
    %v104 = vsub.s32 4294967266, %v99
    %v105 = vadd.s32 %v104, 127
    %v106 = vshll.u32 %v105, 23
    %v107 = vor.u32 4788187, %v106
    %v108 = vand.u32 2147483647, %v107
    %v110 = vcvt.s32.f32 %v103
    %v111 = vmul.f32 %v110, %v108
    %v112 = vxor.u32 %v111, 2147483648
    %v113 = vsel %vm30, %v112, %v111
    %v114 = vsub.s32 4, %v90
    %v115 = vsel %vm30, %v114, %v90
    %v116 = vsel %vm29, %v27, %v113
    %v117 = vsel %vm29, 0, %v115
    %v118 = vcosq.f32.pop %v116
    %v119 = vsinq.f32.pop %v116
    %vm120 = vweird.f32 %v27
    %v121 = vadd.s32 %v117, 3
    %v122 = vand.u32 %v121, 3
    %vm123 = vcmp.lt.s32.totalorder %v122, 2
    %vm124 = vcmp.eq.s32.totalorder %v122, 0
    %v125 = vxor.u32 %v119, 2147483648
    %v126 = vsel %vm124, %v118, %v125
    %vm127 = vcmp.eq.s32.totalorder %v122, 2
    %v128 = vxor.u32 %v118, 2147483648
    %v129 = vsel %vm127, %v128, %v119
    %v130 = vsel %vm123, %v126, %v129
    %v131 = vsel %vm120, nan, %v130
    %v133 = vcombine.high %v131, %v131
    %v134 = vrot.slane %v131, 5
    %v135 = vrot.slane %v133, 5
    %138 = vst [vmem:[#allocation5] sm:$0x38] %v134
    %139 = vst [vmem:[#allocation5 + $0x8] sm:$0x38] %v135
    %v140 = vadd.f32 %v21, 1.5707964
    %v141 = vand.u32 2147483647, %v140
    %vm142 = vcmp.le.f32.partialorder %v141, 0.7853982
    %vm143 = vcmp.lt.s32.totalorder %v140, 0
    %v144 = vand.u32 %v140, 2139095040
    %v145 = vshrl.u32 %v144, 23
    %v146 = vsub.s32 %v145, 127
    %v147 = vand.u32 2147483647, %v140
    %v148 = vand.u32 %v147, 8388607
    %v149 = vor.u32 %v148, 8388608
    %v150 = vsub.s32 0, %v149
    %v151 = vadd.s32 %v146, 1
    %vm152 = vcmp.gt.s32.totalorder %v151, 0
    %v153 = vsel %vm152, %v151, 0
    %v154 = vshrl.u32 %v153, 5
    %v155 = vand.u32 %v153, 31
    %v156 = vsub.s32 32, %v155
    %v157 = vshrl.u32 683565275, %v156
    %v158 = vshll.u32 683565275, %v155
    %v159 = vshrl.u32 2475754826, %v156
    %v160 = vor.u32 %v158, %v159
    %v161 = vshll.u32 2475754826, %v155
    %v162 = vshrl.u32 2131351028, %v156
    %v163 = vor.u32 %v161, %v162
    %v164 = vshll.u32 2131351028, %v155
    %v165 = vshrl.u32 2102212464, %v156
    %v166 = vor.u32 %v164, %v165
    %v167 = vshll.u32 2102212464, %v155
    %v168 = vshrl.u32 920167782, %v156
    %v169 = vor.u32 %v167, %v168
    %v170 = vshll.u32 920167782, %v155
    %v171 = vshrl.u32 1326507024, %v156
    %v172 = vor.u32 %v170, %v171
    %vm173 = vcmp.lt.s32.totalorder %v154, 1
    %vm174 = vcmp.lt.s32.totalorder %v154, 2
    %vm175 = vcmp.lt.s32.totalorder %v154, 3
    %vm176 = vcmp.lt.s32.totalorder %v154, 4
    %v177 = vsel %vm173, %v157, %v160
    %v178 = vsel %vm176, %v166, 2102212464
    %v179 = vsel %vm175, %v163, %v178
    %v180 = vsel %vm174, %v177, %v179
    %v181 = vsel %vm173, %v160, %v163
    %v182 = vsel %vm176, %v169, 920167782
    %v183 = vsel %vm175, %v166, %v182
    %v184 = vsel %vm174, %v181, %v183
    %v185 = vsel %vm173, %v163, %v166
    %v186 = vsel %vm176, %v172, 1326507024
    %v187 = vsel %vm175, %v169, %v186
    %v188 = vsel %vm174, %v185, %v187
    %v189 = vshll.u32 %v149, 8
    %v190 = vmul.u32.u64.compose %v189, %v188
    %v191 = vextract.low.u32 %v190
    %v192 = vextract.high.u32 %v190
    %v193 = vmul.u32.u64.compose %v189, %v184
    %v194 = vextract.low.u32 %v193
    %v195 = vextract.high.u32 %v193
    %v196 = vmul.u32 %v189, %v180
    %v197 = vadd.s32 %v192, %v194
    %vm198 = vc.u32 %v192, %v194
    %v199 = vadd.s32 %v195, 1
    %v200 = vsel %vm198, %v199, %v195
    %v201 = vadd.s32 %v196, %v200
    %v202 = vadd.s32 %v201, 536870912
    %v203 = vshrl.u32 %v202, 30
    %v204 = vshll.u32 %v203, 30
    %v205 = vsub.s32 %v201, %v204
    %vm206 = vcmp.lt.s32.totalorder %v205, 0
    %v207 = vsub.s32 0, %v205
    %v208 = vsel %vm206, %v207, %v205
    %v209 = vclz %v208
    %v210 = vsub.s32 %v209, 2
    %vm211 = vcmp.gt.s32.totalorder 0, %v210
    %v212 = vsel %vm211, 0, %v210
    %v213 = vsub.s32 32, %v212
    %v214 = vshll.u32 %v205, %v212
    %v215 = vshrl.u32 %v197, %v213
    %v216 = vor.u32 %v214, %v215
    %v217 = vsub.s32 4294967266, %v212
    %v218 = vadd.s32 %v217, 127
    %v219 = vshll.u32 %v218, 23
    %v220 = vor.u32 4788187, %v219
    %v221 = vand.u32 2147483647, %v220
    %v223 = vcvt.s32.f32 %v216
    %v224 = vmul.f32 %v223, %v221
    %v225 = vxor.u32 %v224, 2147483648
    %v226 = vsel %vm143, %v225, %v224
    %v227 = vsub.s32 4, %v203
    %v228 = vsel %vm143, %v227, %v203
    %v229 = vsel %vm142, %v140, %v226
    %v230 = vsel %vm142, 0, %v228
    %v231 = vcosq.f32.pop %v229
    %v232 = vsinq.f32.pop %v229
    %vm233 = vweird.f32 %v140
    %v234 = vadd.s32 %v230, 3
    %v235 = vand.u32 %v234, 3
    %vm236 = vcmp.lt.s32.totalorder %v235, 2
    %vm237 = vcmp.eq.s32.totalorder %v235, 0
    %v238 = vxor.u32 %v232, 2147483648
    %v239 = vsel %vm237, %v231, %v238
    %vm240 = vcmp.eq.s32.totalorder %v235, 2
    %v241 = vxor.u32 %v231, 2147483648
    %v242 = vsel %vm240, %v241, %v232
    %v243 = vsel %vm236, %v239, %v242
    %v244 = vsel %vm233, nan, %v243
    %v246 = vcombine.high %v244, %v244
    %v247 = vrot.slane %v244, 2
    %v248 = vrot.slane %v246, 2
    %251 = vst [vmem:[#allocation5] sm:$0xc0] %v247
    %252 = vst [vmem:[#allocation5 + $0x8] sm:$0xc0] %v248
    %253 = vst [vmem:[#allocation5 + $0x10] sm:$0x1] %v247
    %254 = vst [vmem:[#allocation5 + $0x18] sm:$0x1] %v248
    %v255 = vmul.f32 %v21, 2.0
    %v256 = vadd.f32 %v255, 0.0
    %v257 = vand.u32 2147483647, %v256
    %vm258 = vcmp.le.f32.partialorder %v257, 0.7853982
    %vm259 = vcmp.lt.s32.totalorder %v256, 0
    %v260 = vand.u32 %v256, 2139095040
    %v261 = vshrl.u32 %v260, 23
    %v262 = vsub.s32 %v261, 127
    %v263 = vand.u32 2147483647, %v256
    %v264 = vand.u32 %v263, 8388607
    %v265 = vor.u32 %v264, 8388608
    %v266 = vsub.s32 0, %v265
    %v267 = vadd.s32 %v262, 1
    %vm268 = vcmp.gt.s32.totalorder %v267, 0
    %v269 = vsel %vm268, %v267, 0
    %v270 = vshrl.u32 %v269, 5
    %v271 = vand.u32 %v269, 31
    %v272 = vsub.s32 32, %v271
    %v273 = vshrl.u32 683565275, %v272
    %v274 = vshll.u32 683565275, %v271
    %v275 = vshrl.u32 2475754826, %v272
    %v276 = vor.u32 %v274, %v275
    %v277 = vshll.u32 2475754826, %v271
    %v278 = vshrl.u32 2131351028, %v272
    %v279 = vor.u32 %v277, %v278
    %v280 = vshll.u32 2131351028, %v271
    %v281 = vshrl.u32 2102212464, %v272
    %v282 = vor.u32 %v280, %v281
    %v283 = vshll.u32 2102212464, %v271
    %v284 = vshrl.u32 920167782, %v272
    %v285 = vor.u32 %v283, %v284
    %v286 = vshll.u32 920167782, %v271
    %v287 = vshrl.u32 1326507024, %v272
    %v288 = vor.u32 %v286, %v287
    %vm289 = vcmp.lt.s32.totalorder %v270, 1
    %vm290 = vcmp.lt.s32.totalorder %v270, 2
    %vm291 = vcmp.lt.s32.totalorder %v270, 3
    %vm292 = vcmp.lt.s32.totalorder %v270, 4
    %v293 = vsel %vm289, %v273, %v276
    %v294 = vsel %vm292, %v282, 2102212464
    %v295 = vsel %vm291, %v279, %v294
    %v296 = vsel %vm290, %v293, %v295
    %v297 = vsel %vm289, %v276, %v279
    %v298 = vsel %vm292, %v285, 920167782
    %v299 = vsel %vm291, %v282, %v298
    %v300 = vsel %vm290, %v297, %v299
    %v301 = vsel %vm289, %v279, %v282
    %v302 = vsel %vm292, %v288, 1326507024
    %v303 = vsel %vm291, %v285, %v302
    %v304 = vsel %vm290, %v301, %v303
    %v305 = vshll.u32 %v265, 8
    %v306 = vmul.u32.u64.compose %v305, %v304
    %v307 = vextract.low.u32 %v306
    %v308 = vextract.high.u32 %v306
    %v309 = vmul.u32.u64.compose %v305, %v300
    %v310 = vextract.low.u32 %v309
    %v311 = vextract.high.u32 %v309
    %v312 = vmul.u32 %v305, %v296
    %v313 = vadd.s32 %v308, %v310
    %vm314 = vc.u32 %v308, %v310
    %v315 = vadd.s32 %v311, 1
    %v316 = vsel %vm314, %v315, %v311
    %v317 = vadd.s32 %v312, %v316
    %v318 = vadd.s32 %v317, 536870912
    %v319 = vshrl.u32 %v318, 30
    %v320 = vshll.u32 %v319, 30
    %v321 = vsub.s32 %v317, %v320
    %vm322 = vcmp.lt.s32.totalorder %v321, 0
    %v323 = vsub.s32 0, %v321
    %v324 = vsel %vm322, %v323, %v321
    %v325 = vclz %v324
    %v326 = vsub.s32 %v325, 2
    %vm327 = vcmp.gt.s32.totalorder 0, %v326
    %v328 = vsel %vm327, 0, %v326
    %v329 = vsub.s32 32, %v328
    %v330 = vshll.u32 %v321, %v328
    %v331 = vshrl.u32 %v313, %v329
    %v332 = vor.u32 %v330, %v331
    %v333 = vsub.s32 4294967266, %v328
    %v334 = vadd.s32 %v333, 127
    %v335 = vshll.u32 %v334, 23
    %v336 = vor.u32 4788187, %v335
    %v337 = vand.u32 2147483647, %v336
    %v339 = vcvt.s32.f32 %v332
    %v340 = vmul.f32 %v339, %v337
    %v341 = vxor.u32 %v340, 2147483648
    %v342 = vsel %vm259, %v341, %v340
    %v343 = vsub.s32 4, %v319
    %v344 = vsel %vm259, %v343, %v319
    %v345 = vsel %vm258, %v256, %v342
    %v346 = vsel %vm258, 0, %v344
    %v347 = vcosq.f32.pop %v345
    %v348 = vsinq.f32.pop %v345
    %vm349 = vweird.f32 %v256
    %v350 = vadd.s32 %v346, 3
    %v351 = vand.u32 %v350, 3
    %vm352 = vcmp.lt.s32.totalorder %v351, 2
    %vm353 = vcmp.eq.s32.totalorder %v351, 0
    %v354 = vxor.u32 %v348, 2147483648
    %v355 = vsel %vm353, %v347, %v354
    %vm356 = vcmp.eq.s32.totalorder %v351, 2
    %v357 = vxor.u32 %v347, 2147483648
    %v358 = vsel %vm356, %v357, %v348
    %v359 = vsel %vm352, %v355, %v358
    %v360 = vsel %vm349, nan, %v359
    %v362 = vcombine.high %v360, %v360
    %v363 = vrot.slane %v360, 7
    %v364 = vrot.slane %v362, 7
    %367 = vst [vmem:[#allocation5 + $0x10] sm:$0xe] %v363
    %368 = vst [vmem:[#allocation5 + $0x18] sm:$0xe] %v364
    %v369 = vadd.f32 %v255, 1.5707964
    %v370 = vand.u32 2147483647, %v369
    %vm371 = vcmp.le.f32.partialorder %v370, 0.7853982
    %vm372 = vcmp.lt.s32.totalorder %v369, 0
    %v373 = vand.u32 %v369, 2139095040
    %v374 = vshrl.u32 %v373, 23
    %v375 = vsub.s32 %v374, 127
    %v376 = vand.u32 2147483647, %v369
    %v377 = vand.u32 %v376, 8388607
    %v378 = vor.u32 %v377, 8388608
    %v379 = vsub.s32 0, %v378
    %v380 = vadd.s32 %v375, 1
    %vm381 = vcmp.gt.s32.totalorder %v380, 0
    %v382 = vsel %vm381, %v380, 0
    %v383 = vshrl.u32 %v382, 5
    %v384 = vand.u32 %v382, 31
    %v385 = vsub.s32 32, %v384
    %v386 = vshrl.u32 683565275, %v385
    %v387 = vshll.u32 683565275, %v384
    %v388 = vshrl.u32 2475754826, %v385
    %v389 = vor.u32 %v387, %v388
    %v390 = vshll.u32 2475754826, %v384
    %v391 = vshrl.u32 2131351028, %v385
    %v392 = vor.u32 %v390, %v391
    %v393 = vshll.u32 2131351028, %v384
    %v394 = vshrl.u32 2102212464, %v385
    %v395 = vor.u32 %v393, %v394
    %v396 = vshll.u32 2102212464, %v384
    %v397 = vshrl.u32 920167782, %v385
    %v398 = vor.u32 %v396, %v397
    %v399 = vshll.u32 920167782, %v384
    %v400 = vshrl.u32 1326507024, %v385
    %v401 = vor.u32 %v399, %v400
    %vm402 = vcmp.lt.s32.totalorder %v383, 1
    %vm403 = vcmp.lt.s32.totalorder %v383, 2
    %vm404 = vcmp.lt.s32.totalorder %v383, 3
    %vm405 = vcmp.lt.s32.totalorder %v383, 4
    %v406 = vsel %vm402, %v386, %v389
    %v407 = vsel %vm405, %v395, 2102212464
    %v408 = vsel %vm404, %v392, %v407
    %v409 = vsel %vm403, %v406, %v408
    %v410 = vsel %vm402, %v389, %v392
    %v411 = vsel %vm405, %v398, 920167782
    %v412 = vsel %vm404, %v395, %v411
    %v413 = vsel %vm403, %v410, %v412
    %v414 = vsel %vm402, %v392, %v395
    %v415 = vsel %vm405, %v401, 1326507024
    %v416 = vsel %vm404, %v398, %v415
    %v417 = vsel %vm403, %v414, %v416
    %v418 = vshll.u32 %v378, 8
    %v419 = vmul.u32.u64.compose %v418, %v417
    %v420 = vextract.low.u32 %v419
    %v421 = vextract.high.u32 %v419
    %v422 = vmul.u32.u64.compose %v418, %v413
    %v423 = vextract.low.u32 %v422
    %v424 = vextract.high.u32 %v422
    %v425 = vmul.u32 %v418, %v409
    %v426 = vadd.s32 %v421, %v423
    %vm427 = vc.u32 %v421, %v423
    %v428 = vadd.s32 %v424, 1
    %v429 = vsel %vm427, %v428, %v424
    %v430 = vadd.s32 %v425, %v429
    %v431 = vadd.s32 %v430, 536870912
    %v432 = vshrl.u32 %v431, 30
    %v433 = vshll.u32 %v432, 30
    %v434 = vsub.s32 %v430, %v433
    %vm435 = vcmp.lt.s32.totalorder %v434, 0
    %v436 = vsub.s32 0, %v434
    %v437 = vsel %vm435, %v436, %v434
    %v438 = vclz %v437
    %v439 = vsub.s32 %v438, 2
    %vm440 = vcmp.gt.s32.totalorder 0, %v439
    %v441 = vsel %vm440, 0, %v439
    %v442 = vsub.s32 32, %v441
    %v443 = vshll.u32 %v434, %v441
    %v444 = vshrl.u32 %v426, %v442
    %v445 = vor.u32 %v443, %v444
    %v446 = vsub.s32 4294967266, %v441
    %v447 = vadd.s32 %v446, 127
    %v448 = vshll.u32 %v447, 23
    %v449 = vor.u32 4788187, %v448
    %v450 = vand.u32 2147483647, %v449
    %v452 = vcvt.s32.f32 %v445
    %v453 = vmul.f32 %v452, %v450
    %v454 = vxor.u32 %v453, 2147483648
    %v455 = vsel %vm372, %v454, %v453
    %v456 = vsub.s32 4, %v432
    %v457 = vsel %vm372, %v456, %v432
    %v458 = vsel %vm371, %v369, %v455
    %v459 = vsel %vm371, 0, %v457
    %v460 = vcosq.f32.pop %v458
    %v461 = vsinq.f32.pop %v458
    %vm462 = vweird.f32 %v369
    %v463 = vadd.s32 %v459, 3
    %v464 = vand.u32 %v463, 3
    %vm465 = vcmp.lt.s32.totalorder %v464, 2
    %vm466 = vcmp.eq.s32.totalorder %v464, 0
    %v467 = vxor.u32 %v461, 2147483648
    %v468 = vsel %vm466, %v460, %v467
    %vm469 = vcmp.eq.s32.totalorder %v464, 2
    %v470 = vxor.u32 %v460, 2147483648
    %v471 = vsel %vm469, %v470, %v461
    %v472 = vsel %vm465, %v468, %v471
    %v473 = vsel %vm462, nan, %v472
    %v475 = vcombine.low %v473, %v473
    %477 = vst [vmem:[#allocation5 + $0x10] sm:$0x70] %v475
    %478 = vst [vmem:[#allocation5 + $0x18] sm:$0x70] %v473
    %v479 = vmul.f32 %v21, 4.0
    %v480 = vadd.f32 %v479, 0.0
    %v481 = vand.u32 2147483647, %v480
    %vm482 = vcmp.le.f32.partialorder %v481, 0.7853982
    %vm483 = vcmp.lt.s32.totalorder %v480, 0
    %v484 = vand.u32 %v480, 2139095040
    %v485 = vshrl.u32 %v484, 23
    %v486 = vsub.s32 %v485, 127
    %v487 = vand.u32 2147483647, %v480
    %v488 = vand.u32 %v487, 8388607
    %v489 = vor.u32 %v488, 8388608
    %v490 = vsub.s32 0, %v489
    %v491 = vadd.s32 %v486, 1
    %vm492 = vcmp.gt.s32.totalorder %v491, 0
    %v493 = vsel %vm492, %v491, 0
    %v494 = vshrl.u32 %v493, 5
    %v495 = vand.u32 %v493, 31
    %v496 = vsub.s32 32, %v495
    %v497 = vshrl.u32 683565275, %v496
    %v498 = vshll.u32 683565275, %v495
    %v499 = vshrl.u32 2475754826, %v496
    %v500 = vor.u32 %v498, %v499
    %v501 = vshll.u32 2475754826, %v495
    %v502 = vshrl.u32 2131351028, %v496
    %v503 = vor.u32 %v501, %v502
    %v504 = vshll.u32 2131351028, %v495
    %v505 = vshrl.u32 2102212464, %v496
    %v506 = vor.u32 %v504, %v505
    %v507 = vshll.u32 2102212464, %v495
    %v508 = vshrl.u32 920167782, %v496
    %v509 = vor.u32 %v507, %v508
    %v510 = vshll.u32 920167782, %v495
    %v511 = vshrl.u32 1326507024, %v496
    %v512 = vor.u32 %v510, %v511
    %vm513 = vcmp.lt.s32.totalorder %v494, 1
    %vm514 = vcmp.lt.s32.totalorder %v494, 2
    %vm515 = vcmp.lt.s32.totalorder %v494, 3
    %vm516 = vcmp.lt.s32.totalorder %v494, 4
    %v517 = vsel %vm513, %v497, %v500
    %v518 = vsel %vm516, %v506, 2102212464
    %v519 = vsel %vm515, %v503, %v518
    %v520 = vsel %vm514, %v517, %v519
    %v521 = vsel %vm513, %v500, %v503
    %v522 = vsel %vm516, %v509, 920167782
    %v523 = vsel %vm515, %v506, %v522
    %v524 = vsel %vm514, %v521, %v523
    %v525 = vsel %vm513, %v503, %v506
    %v526 = vsel %vm516, %v512, 1326507024
    %v527 = vsel %vm515, %v509, %v526
    %v528 = vsel %vm514, %v525, %v527
    %v529 = vshll.u32 %v489, 8
    %v530 = vmul.u32.u64.compose %v529, %v528
    %v531 = vextract.low.u32 %v530
    %v532 = vextract.high.u32 %v530
    %v533 = vmul.u32.u64.compose %v529, %v524
    %v534 = vextract.low.u32 %v533
    %v535 = vextract.high.u32 %v533
    %v536 = vmul.u32 %v529, %v520
    %v537 = vadd.s32 %v532, %v534
    %vm538 = vc.u32 %v532, %v534
    %v539 = vadd.s32 %v535, 1
    %v540 = vsel %vm538, %v539, %v535
    %v541 = vadd.s32 %v536, %v540
    %v542 = vadd.s32 %v541, 536870912
    %v543 = vshrl.u32 %v542, 30
    %v544 = vshll.u32 %v543, 30
    %v545 = vsub.s32 %v541, %v544
    %vm546 = vcmp.lt.s32.totalorder %v545, 0
    %v547 = vsub.s32 0, %v545
    %v548 = vsel %vm546, %v547, %v545
    %v549 = vclz %v548
    %v550 = vsub.s32 %v549, 2
    %vm551 = vcmp.gt.s32.totalorder 0, %v550
    %v552 = vsel %vm551, 0, %v550
    %v553 = vsub.s32 32, %v552
    %v554 = vshll.u32 %v545, %v552
    %v555 = vshrl.u32 %v537, %v553
    %v556 = vor.u32 %v554, %v555
    %v557 = vsub.s32 4294967266, %v552
    %v558 = vadd.s32 %v557, 127
    %v559 = vshll.u32 %v558, 23
    %v560 = vor.u32 4788187, %v559
    %v561 = vand.u32 2147483647, %v560
    %v563 = vcvt.s32.f32 %v556
    %v564 = vmul.f32 %v563, %v561
    %v565 = vxor.u32 %v564, 2147483648
    %v566 = vsel %vm483, %v565, %v564
    %v567 = vsub.s32 4, %v543
    %v568 = vsel %vm483, %v567, %v543
    %v569 = vsel %vm482, %v480, %v566
    %v570 = vsel %vm482, 0, %v568
    %v571 = vcosq.f32.pop %v569
    %v572 = vsinq.f32.pop %v569
    %vm573 = vweird.f32 %v480
    %v574 = vadd.s32 %v570, 3
    %v575 = vand.u32 %v574, 3
    %vm576 = vcmp.lt.s32.totalorder %v575, 2
    %vm577 = vcmp.eq.s32.totalorder %v575, 0
    %v578 = vxor.u32 %v572, 2147483648
    %v579 = vsel %vm577, %v571, %v578
    %vm580 = vcmp.eq.s32.totalorder %v575, 2
    %v581 = vxor.u32 %v571, 2147483648
    %v582 = vsel %vm580, %v581, %v572
    %v583 = vsel %vm576, %v579, %v582
    %v584 = vsel %vm573, nan, %v583
    %v586 = vcombine.high %v584, %v584
    %v587 = vrot.slane %v584, 1
    %v588 = vrot.slane %v586, 1
    %591 = vst [vmem:[#allocation5 + $0x10] sm:$0x80] %v587
    %592 = vst [vmem:[#allocation5 + $0x18] sm:$0x80] %v588
    %593 = vst [vmem:[#allocation5 + $0x20] sm:$0x3] %v587
    %594 = vst [vmem:[#allocation5 + $0x28] sm:$0x3] %v588
    %v595 = vadd.f32 %v479, 1.5707964
    %v596 = vand.u32 2147483647, %v595
    %vm597 = vcmp.le.f32.partialorder %v596, 0.7853982
    %vm598 = vcmp.lt.s32.totalorder %v595, 0
    %v599 = vand.u32 %v595, 2139095040
    %v600 = vshrl.u32 %v599, 23
    %v601 = vsub.s32 %v600, 127
    %v602 = vand.u32 2147483647, %v595
    %v603 = vand.u32 %v602, 8388607
    %v604 = vor.u32 %v603, 8388608
    %v605 = vsub.s32 0, %v604
    %v606 = vadd.s32 %v601, 1
    %vm607 = vcmp.gt.s32.totalorder %v606, 0
    %v608 = vsel %vm607, %v606, 0
    %v609 = vshrl.u32 %v608, 5
    %v610 = vand.u32 %v608, 31
    %v611 = vsub.s32 32, %v610
    %v612 = vshrl.u32 683565275, %v611
    %v613 = vshll.u32 683565275, %v610
    %v614 = vshrl.u32 2475754826, %v611
    %v615 = vor.u32 %v613, %v614
    %v616 = vshll.u32 2475754826, %v610
    %v617 = vshrl.u32 2131351028, %v611
    %v618 = vor.u32 %v616, %v617
    %v619 = vshll.u32 2131351028, %v610
    %v620 = vshrl.u32 2102212464, %v611
    %v621 = vor.u32 %v619, %v620
    %v622 = vshll.u32 2102212464, %v610
    %v623 = vshrl.u32 920167782, %v611
    %v624 = vor.u32 %v622, %v623
    %v625 = vshll.u32 920167782, %v610
    %v626 = vshrl.u32 1326507024, %v611
    %v627 = vor.u32 %v625, %v626
    %vm628 = vcmp.lt.s32.totalorder %v609, 1
    %vm629 = vcmp.lt.s32.totalorder %v609, 2
    %vm630 = vcmp.lt.s32.totalorder %v609, 3
    %vm631 = vcmp.lt.s32.totalorder %v609, 4
    %v632 = vsel %vm628, %v612, %v615
    %v633 = vsel %vm631, %v621, 2102212464
    %v634 = vsel %vm630, %v618, %v633
    %v635 = vsel %vm629, %v632, %v634
    %v636 = vsel %vm628, %v615, %v618
    %v637 = vsel %vm631, %v624, 920167782
    %v638 = vsel %vm630, %v621, %v637
    %v639 = vsel %vm629, %v636, %v638
    %v640 = vsel %vm628, %v618, %v621
    %v641 = vsel %vm631, %v627, 1326507024
    %v642 = vsel %vm630, %v624, %v641
    %v643 = vsel %vm629, %v640, %v642
    %v644 = vshll.u32 %v604, 8
    %v645 = vmul.u32.u64.compose %v644, %v643
    %v646 = vextract.low.u32 %v645
    %v647 = vextract.high.u32 %v645
    %v648 = vmul.u32.u64.compose %v644, %v639
    %v649 = vextract.low.u32 %v648
    %v650 = vextract.high.u32 %v648
    %v651 = vmul.u32 %v644, %v635
    %v652 = vadd.s32 %v647, %v649
    %vm653 = vc.u32 %v647, %v649
    %v654 = vadd.s32 %v650, 1
    %v655 = vsel %vm653, %v654, %v650
    %v656 = vadd.s32 %v651, %v655
    %v657 = vadd.s32 %v656, 536870912
    %v658 = vshrl.u32 %v657, 30
    %v659 = vshll.u32 %v658, 30
    %v660 = vsub.s32 %v656, %v659
    %vm661 = vcmp.lt.s32.totalorder %v660, 0
    %v662 = vsub.s32 0, %v660
    %v663 = vsel %vm661, %v662, %v660
    %v664 = vclz %v663
    %v665 = vsub.s32 %v664, 2
    %vm666 = vcmp.gt.s32.totalorder 0, %v665
    %v667 = vsel %vm666, 0, %v665
    %v668 = vsub.s32 32, %v667
    %v669 = vshll.u32 %v660, %v667
    %v670 = vshrl.u32 %v652, %v668
    %v671 = vor.u32 %v669, %v670
    %v672 = vsub.s32 4294967266, %v667
    %v673 = vadd.s32 %v672, 127
    %v674 = vshll.u32 %v673, 23
    %v675 = vor.u32 4788187, %v674
    %v676 = vand.u32 2147483647, %v675
    %v678 = vcvt.s32.f32 %v671
    %v679 = vmul.f32 %v678, %v676
    %v680 = vxor.u32 %v679, 2147483648
    %v681 = vsel %vm598, %v680, %v679
    %v682 = vsub.s32 4, %v658
    %v683 = vsel %vm598, %v682, %v658
    %v684 = vsel %vm597, %v595, %v681
    %v685 = vsel %vm597, 0, %v683
    %v686 = vcosq.f32.pop %v684
    %v687 = vsinq.f32.pop %v684
    %vm688 = vweird.f32 %v595
    %v689 = vadd.s32 %v685, 3
    %v690 = vand.u32 %v689, 3
    %vm691 = vcmp.lt.s32.totalorder %v690, 2
    %vm692 = vcmp.eq.s32.totalorder %v690, 0
    %v693 = vxor.u32 %v687, 2147483648
    %v694 = vsel %vm692, %v686, %v693
    %vm695 = vcmp.eq.s32.totalorder %v690, 2
    %v696 = vxor.u32 %v686, 2147483648
    %v697 = vsel %vm695, %v696, %v687
    %v698 = vsel %vm691, %v694, %v697
    %v699 = vsel %vm688, nan, %v698
    %v701 = vcombine.high %v699, %v699
    %v702 = vrot.slane %v699, 6
    %v703 = vrot.slane %v701, 6
    %706 = vst [vmem:[#allocation5 + $0x20] sm:$0x1c] %v702
    %707 = vst [vmem:[#allocation5 + $0x28] sm:$0x1c] %v703
    %v708 = vmul.f32 %v21, 8.0
    %v709 = vadd.f32 %v708, 0.0
    %v710 = vand.u32 2147483647, %v709
    %vm711 = vcmp.le.f32.partialorder %v710, 0.7853982
    %vm712 = vcmp.lt.s32.totalorder %v709, 0
    %v713 = vand.u32 %v709, 2139095040
    %v714 = vshrl.u32 %v713, 23
    %v715 = vsub.s32 %v714, 127
    %v716 = vand.u32 2147483647, %v709
    %v717 = vand.u32 %v716, 8388607
    %v718 = vor.u32 %v717, 8388608
    %v719 = vsub.s32 0, %v718
    %v720 = vadd.s32 %v715, 1
    %vm721 = vcmp.gt.s32.totalorder %v720, 0
    %v722 = vsel %vm721, %v720, 0
    %v723 = vshrl.u32 %v722, 5
    %v724 = vand.u32 %v722, 31
    %v725 = vsub.s32 32, %v724
    %v726 = vshrl.u32 683565275, %v725
    %v727 = vshll.u32 683565275, %v724
    %v728 = vshrl.u32 2475754826, %v725
    %v729 = vor.u32 %v727, %v728
    %v730 = vshll.u32 2475754826, %v724
    %v731 = vshrl.u32 2131351028, %v725
    %v732 = vor.u32 %v730, %v731
    %v733 = vshll.u32 2131351028, %v724
    %v734 = vshrl.u32 2102212464, %v725
    %v735 = vor.u32 %v733, %v734
    %v736 = vshll.u32 2102212464, %v724
    %v737 = vshrl.u32 920167782, %v725
    %v738 = vor.u32 %v736, %v737
    %v739 = vshll.u32 920167782, %v724
    %v740 = vshrl.u32 1326507024, %v725
    %v741 = vor.u32 %v739, %v740
    %vm742 = vcmp.lt.s32.totalorder %v723, 1
    %vm743 = vcmp.lt.s32.totalorder %v723, 2
    %vm744 = vcmp.lt.s32.totalorder %v723, 3
    %vm745 = vcmp.lt.s32.totalorder %v723, 4
    %v746 = vsel %vm742, %v726, %v729
    %v747 = vsel %vm745, %v735, 2102212464
    %v748 = vsel %vm744, %v732, %v747
    %v749 = vsel %vm743, %v746, %v748
    %v750 = vsel %vm742, %v729, %v732
    %v751 = vsel %vm745, %v738, 920167782
    %v752 = vsel %vm744, %v735, %v751
    %v753 = vsel %vm743, %v750, %v752
    %v754 = vsel %vm742, %v732, %v735
    %v755 = vsel %vm745, %v741, 1326507024
    %v756 = vsel %vm744, %v738, %v755
    %v757 = vsel %vm743, %v754, %v756
    %v758 = vshll.u32 %v718, 8
    %v759 = vmul.u32.u64.compose %v758, %v757
    %v760 = vextract.low.u32 %v759
    %v761 = vextract.high.u32 %v759
    %v762 = vmul.u32.u64.compose %v758, %v753
    %v763 = vextract.low.u32 %v762
    %v764 = vextract.high.u32 %v762
    %v765 = vmul.u32 %v758, %v749
    %v766 = vadd.s32 %v761, %v763
    %vm767 = vc.u32 %v761, %v763
    %v768 = vadd.s32 %v764, 1
    %v769 = vsel %vm767, %v768, %v764
    %v770 = vadd.s32 %v765, %v769
    %v771 = vadd.s32 %v770, 536870912
    %v772 = vshrl.u32 %v771, 30
    %v773 = vshll.u32 %v772, 30
    %v774 = vsub.s32 %v770, %v773
    %vm775 = vcmp.lt.s32.totalorder %v774, 0
    %v776 = vsub.s32 0, %v774
    %v777 = vsel %vm775, %v776, %v774
    %v778 = vclz %v777
    %v779 = vsub.s32 %v778, 2
    %vm780 = vcmp.gt.s32.totalorder 0, %v779
    %v781 = vsel %vm780, 0, %v779
    %v782 = vsub.s32 32, %v781
    %v783 = vshll.u32 %v774, %v781
    %v784 = vshrl.u32 %v766, %v782
    %v785 = vor.u32 %v783, %v784
    %v786 = vsub.s32 4294967266, %v781
    %v787 = vadd.s32 %v786, 127
    %v788 = vshll.u32 %v787, 23
    %v789 = vor.u32 4788187, %v788
    %v790 = vand.u32 2147483647, %v789
    %v792 = vcvt.s32.f32 %v785
    %v793 = vmul.f32 %v792, %v790
    %v794 = vxor.u32 %v793, 2147483648
    %v795 = vsel %vm712, %v794, %v793
    %v796 = vsub.s32 4, %v772
    %v797 = vsel %vm712, %v796, %v772
    %v798 = vsel %vm711, %v709, %v795
    %v799 = vsel %vm711, 0, %v797
    %v800 = vcosq.f32.pop %v798
    %v801 = vsinq.f32.pop %v798
    %vm802 = vweird.f32 %v709
    %v803 = vadd.s32 %v799, 3
    %v804 = vand.u32 %v803, 3
    %vm805 = vcmp.lt.s32.totalorder %v804, 2
    %vm806 = vcmp.eq.s32.totalorder %v804, 0
    %v807 = vxor.u32 %v801, 2147483648
    %v808 = vsel %vm806, %v800, %v807
    %vm809 = vcmp.eq.s32.totalorder %v804, 2
    %v810 = vxor.u32 %v800, 2147483648
    %v811 = vsel %vm809, %v810, %v801
    %v812 = vsel %vm805, %v808, %v811
    %v813 = vsel %vm802, nan, %v812
    %v815 = vcombine.high %v813, %v813
    %v816 = vrot.slane %v813, 3
    %v817 = vrot.slane %v815, 3
    %820 = vst [vmem:[#allocation5 + $0x20] sm:$0xe0] %v816
    %821 = vst [vmem:[#allocation5 + $0x28] sm:$0xe0] %v817
    %v822 = vadd.f32 %v708, 1.5707964
    %v823 = vand.u32 2147483647, %v822
    %vm824 = vcmp.le.f32.partialorder %v823, 0.7853982
    %vm825 = vcmp.lt.s32.totalorder %v822, 0
    %v826 = vand.u32 %v822, 2139095040
    %v827 = vshrl.u32 %v826, 23
    %v828 = vsub.s32 %v827, 127
    %v829 = vand.u32 2147483647, %v822
    %v830 = vand.u32 %v829, 8388607
    %v831 = vor.u32 %v830, 8388608
    %v832 = vsub.s32 0, %v831
    %v833 = vadd.s32 %v828, 1
    %vm834 = vcmp.gt.s32.totalorder %v833, 0
    %v835 = vsel %vm834, %v833, 0
    %v836 = vshrl.u32 %v835, 5
    %v837 = vand.u32 %v835, 31
    %v838 = vsub.s32 32, %v837
    %v839 = vshrl.u32 683565275, %v838
    %v840 = vshll.u32 683565275, %v837
    %v841 = vshrl.u32 2475754826, %v838
    %v842 = vor.u32 %v840, %v841
    %v843 = vshll.u32 2475754826, %v837
    %v844 = vshrl.u32 2131351028, %v838
    %v845 = vor.u32 %v843, %v844
    %v846 = vshll.u32 2131351028, %v837
    %v847 = vshrl.u32 2102212464, %v838
    %v848 = vor.u32 %v846, %v847
    %v849 = vshll.u32 2102212464, %v837
    %v850 = vshrl.u32 920167782, %v838
    %v851 = vor.u32 %v849, %v850
    %v852 = vshll.u32 920167782, %v837
    %v853 = vshrl.u32 1326507024, %v838
    %v854 = vor.u32 %v852, %v853
    %vm855 = vcmp.lt.s32.totalorder %v836, 1
    %vm856 = vcmp.lt.s32.totalorder %v836, 2
    %vm857 = vcmp.lt.s32.totalorder %v836, 3
    %vm858 = vcmp.lt.s32.totalorder %v836, 4
    %v859 = vsel %vm855, %v839, %v842
    %v860 = vsel %vm858, %v848, 2102212464
    %v861 = vsel %vm857, %v845, %v860
    %v862 = vsel %vm856, %v859, %v861
    %v863 = vsel %vm855, %v842, %v845
    %v864 = vsel %vm858, %v851, 920167782
    %v865 = vsel %vm857, %v848, %v864
    %v866 = vsel %vm856, %v863, %v865
    %v867 = vsel %vm855, %v845, %v848
    %v868 = vsel %vm858, %v854, 1326507024
    %v869 = vsel %vm857, %v851, %v868
    %v870 = vsel %vm856, %v867, %v869
    %v871 = vshll.u32 %v831, 8
    %v872 = vmul.u32.u64.compose %v871, %v870
    %v873 = vextract.low.u32 %v872
    %v874 = vextract.high.u32 %v872
    %v875 = vmul.u32.u64.compose %v871, %v866
    %v876 = vextract.low.u32 %v875
    %v877 = vextract.high.u32 %v875
    %v878 = vmul.u32 %v871, %v862
    %v879 = vadd.s32 %v874, %v876
    %vm880 = vc.u32 %v874, %v876
    %v881 = vadd.s32 %v877, 1
    %v882 = vsel %vm880, %v881, %v877
    %v883 = vadd.s32 %v878, %v882
    %v884 = vadd.s32 %v883, 536870912
    %v885 = vshrl.u32 %v884, 30
    %v886 = vshll.u32 %v885, 30
    %v887 = vsub.s32 %v883, %v886
    %vm888 = vcmp.lt.s32.totalorder %v887, 0
    %v889 = vsub.s32 0, %v887
    %v890 = vsel %vm888, %v889, %v887
    %v891 = vclz %v890
    %v892 = vsub.s32 %v891, 2
    %vm893 = vcmp.gt.s32.totalorder 0, %v892
    %v894 = vsel %vm893, 0, %v892
    %v895 = vsub.s32 32, %v894
    %v896 = vshll.u32 %v887, %v894
    %v897 = vshrl.u32 %v879, %v895
    %v898 = vor.u32 %v896, %v897
    %v899 = vsub.s32 4294967266, %v894
    %v900 = vadd.s32 %v899, 127
    %v901 = vshll.u32 %v900, 23
    %v902 = vor.u32 4788187, %v901
    %v903 = vand.u32 2147483647, %v902
    %v905 = vcvt.s32.f32 %v898
    %v906 = vmul.f32 %v905, %v903
    %v907 = vxor.u32 %v906, 2147483648
    %v908 = vsel %vm825, %v907, %v906
    %v909 = vsub.s32 4, %v885
    %v910 = vsel %vm825, %v909, %v885
    %v911 = vsel %vm824, %v822, %v908
    %v912 = vsel %vm824, 0, %v910
    %v913 = vcosq.f32.pop %v911
    %v914 = vsinq.f32.pop %v911
    %vm915 = vweird.f32 %v822
    %v916 = vadd.s32 %v912, 3
    %v917 = vand.u32 %v916, 3
    %vm918 = vcmp.lt.s32.totalorder %v917, 2
    %vm919 = vcmp.eq.s32.totalorder %v917, 0
    %v920 = vxor.u32 %v914, 2147483648
    %v921 = vsel %vm919, %v913, %v920
    %vm922 = vcmp.eq.s32.totalorder %v917, 2
    %v923 = vxor.u32 %v913, 2147483648
    %v924 = vsel %vm922, %v923, %v914
    %v925 = vsel %vm918, %v921, %v924
    %v926 = vsel %vm915, nan, %v925
    %v928 = vcombine.high %v926, %v926
    %930 = vst [vmem:[#allocation5 + $0x30] sm:$0x7] %v926
    %931 = vst [vmem:[#allocation5 + $0x38] sm:$0x7] %v928
    %v932 = vmul.f32 %v21, 16.0
    %v933 = vadd.f32 %v932, 0.0
    %v934 = vand.u32 2147483647, %v933
    %vm935 = vcmp.le.f32.partialorder %v934, 0.7853982
    %vm936 = vcmp.lt.s32.totalorder %v933, 0
    %v937 = vand.u32 %v933, 2139095040
    %v938 = vshrl.u32 %v937, 23
    %v939 = vsub.s32 %v938, 127
    %v940 = vand.u32 2147483647, %v933
    %v941 = vand.u32 %v940, 8388607
    %v942 = vor.u32 %v941, 8388608
    %v943 = vsub.s32 0, %v942
    %v944 = vadd.s32 %v939, 1
    %vm945 = vcmp.gt.s32.totalorder %v944, 0
    %v946 = vsel %vm945, %v944, 0
    %v947 = vshrl.u32 %v946, 5
    %v948 = vand.u32 %v946, 31
    %v949 = vsub.s32 32, %v948
    %v950 = vshrl.u32 683565275, %v949
    %v951 = vshll.u32 683565275, %v948
    %v952 = vshrl.u32 2475754826, %v949
    %v953 = vor.u32 %v951, %v952
    %v954 = vshll.u32 2475754826, %v948
    %v955 = vshrl.u32 2131351028, %v949
    %v956 = vor.u32 %v954, %v955
    %v957 = vshll.u32 2131351028, %v948
    %v958 = vshrl.u32 2102212464, %v949
    %v959 = vor.u32 %v957, %v958
    %v960 = vshll.u32 2102212464, %v948
    %v961 = vshrl.u32 920167782, %v949
    %v962 = vor.u32 %v960, %v961
    %v963 = vshll.u32 920167782, %v948
    %v964 = vshrl.u32 1326507024, %v949
    %v965 = vor.u32 %v963, %v964
    %vm966 = vcmp.lt.s32.totalorder %v947, 1
    %vm967 = vcmp.lt.s32.totalorder %v947, 2
    %vm968 = vcmp.lt.s32.totalorder %v947, 3
    %vm969 = vcmp.lt.s32.totalorder %v947, 4
    %v970 = vsel %vm966, %v950, %v953
    %v971 = vsel %vm969, %v959, 2102212464
    %v972 = vsel %vm968, %v956, %v971
    %v973 = vsel %vm967, %v970, %v972
    %v974 = vsel %vm966, %v953, %v956
    %v975 = vsel %vm969, %v962, 920167782
    %v976 = vsel %vm968, %v959, %v975
    %v977 = vsel %vm967, %v974, %v976
    %v978 = vsel %vm966, %v956, %v959
    %v979 = vsel %vm969, %v965, 1326507024
    %v980 = vsel %vm968, %v962, %v979
    %v981 = vsel %vm967, %v978, %v980
    %v982 = vshll.u32 %v942, 8
    %v983 = vmul.u32.u64.compose %v982, %v981
    %v984 = vextract.low.u32 %v983
    %v985 = vextract.high.u32 %v983
    %v986 = vmul.u32.u64.compose %v982, %v977
    %v987 = vextract.low.u32 %v986
    %v988 = vextract.high.u32 %v986
    %v989 = vmul.u32 %v982, %v973
    %v990 = vadd.s32 %v985, %v987
    %vm991 = vc.u32 %v985, %v987
    %v992 = vadd.s32 %v988, 1
    %v993 = vsel %vm991, %v992, %v988
    %v994 = vadd.s32 %v989, %v993
    %v995 = vadd.s32 %v994, 536870912
    %v996 = vshrl.u32 %v995, 30
    %v997 = vshll.u32 %v996, 30
    %v998 = vsub.s32 %v994, %v997
    %vm999 = vcmp.lt.s32.totalorder %v998, 0
    %v1000 = vsub.s32 0, %v998
    %v1001 = vsel %vm999, %v1000, %v998
    %v1002 = vclz %v1001
    %v1003 = vsub.s32 %v1002, 2
    %vm1004 = vcmp.gt.s32.totalorder 0, %v1003
    %v1005 = vsel %vm1004, 0, %v1003
    %v1006 = vsub.s32 32, %v1005
    %v1007 = vshll.u32 %v998, %v1005
    %v1008 = vshrl.u32 %v990, %v1006
    %v1009 = vor.u32 %v1007, %v1008
    %v1010 = vsub.s32 4294967266, %v1005
    %v1011 = vadd.s32 %v1010, 127
    %v1012 = vshll.u32 %v1011, 23
    %v1013 = vor.u32 4788187, %v1012
    %v1014 = vand.u32 2147483647, %v1013
    %v1016 = vcvt.s32.f32 %v1009
    %v1017 = vmul.f32 %v1016, %v1014
    %v1018 = vxor.u32 %v1017, 2147483648
    %v1019 = vsel %vm936, %v1018, %v1017
    %v1020 = vsub.s32 4, %v996
    %v1021 = vsel %vm936, %v1020, %v996
    %v1022 = vsel %vm935, %v933, %v1019
    %v1023 = vsel %vm935, 0, %v1021
    %v1024 = vcosq.f32.pop %v1022
    %v1025 = vsinq.f32.pop %v1022
    %vm1026 = vweird.f32 %v933
    %v1027 = vadd.s32 %v1023, 3
    %v1028 = vand.u32 %v1027, 3
    %vm1029 = vcmp.lt.s32.totalorder %v1028, 2
    %vm1030 = vcmp.eq.s32.totalorder %v1028, 0
    %v1031 = vxor.u32 %v1025, 2147483648
    %v1032 = vsel %vm1030, %v1024, %v1031
    %vm1033 = vcmp.eq.s32.totalorder %v1028, 2
    %v1034 = vxor.u32 %v1024, 2147483648
    %v1035 = vsel %vm1033, %v1034, %v1025
    %v1036 = vsel %vm1029, %v1032, %v1035
    %v1037 = vsel %vm1026, nan, %v1036
    %v1039 = vcombine.high %v1037, %v1037
    %v1040 = vrot.slane %v1037, 5
    %v1041 = vrot.slane %v1039, 5
    %1044 = vst [vmem:[#allocation5 + $0x30] sm:$0x38] %v1040
    %1045 = vst [vmem:[#allocation5 + $0x38] sm:$0x38] %v1041
    %v1046 = vadd.f32 %v932, 1.5707964
    %v1047 = vand.u32 2147483647, %v1046
    %vm1048 = vcmp.le.f32.partialorder %v1047, 0.7853982
    %vm1049 = vcmp.lt.s32.totalorder %v1046, 0
    %v1050 = vand.u32 %v1046, 2139095040
    %v1051 = vshrl.u32 %v1050, 23
    %v1052 = vsub.s32 %v1051, 127
    %v1053 = vand.u32 2147483647, %v1046
    %v1054 = vand.u32 %v1053, 8388607
    %v1055 = vor.u32 %v1054, 8388608
    %v1056 = vsub.s32 0, %v1055
    %v1057 = vadd.s32 %v1052, 1
    %vm1058 = vcmp.gt.s32.totalorder %v1057, 0
    %v1059 = vsel %vm1058, %v1057, 0
    %v1060 = vshrl.u32 %v1059, 5
    %v1061 = vand.u32 %v1059, 31
    %v1062 = vsub.s32 32, %v1061
    %v1063 = vshrl.u32 683565275, %v1062
    %v1064 = vshll.u32 683565275, %v1061
    %v1065 = vshrl.u32 2475754826, %v1062
    %v1066 = vor.u32 %v1064, %v1065
    %v1067 = vshll.u32 2475754826, %v1061
    %v1068 = vshrl.u32 2131351028, %v1062
    %v1069 = vor.u32 %v1067, %v1068
    %v1070 = vshll.u32 2131351028, %v1061
    %v1071 = vshrl.u32 2102212464, %v1062
    %v1072 = vor.u32 %v1070, %v1071
    %v1073 = vshll.u32 2102212464, %v1061
    %v1074 = vshrl.u32 920167782, %v1062
    %v1075 = vor.u32 %v1073, %v1074
    %v1076 = vshll.u32 920167782, %v1061
    %v1077 = vshrl.u32 1326507024, %v1062
    %v1078 = vor.u32 %v1076, %v1077
    %vm1079 = vcmp.lt.s32.totalorder %v1060, 1
    %vm1080 = vcmp.lt.s32.totalorder %v1060, 2
    %vm1081 = vcmp.lt.s32.totalorder %v1060, 3
    %vm1082 = vcmp.lt.s32.totalorder %v1060, 4
    %v1083 = vsel %vm1079, %v1063, %v1066
    %v1084 = vsel %vm1082, %v1072, 2102212464
    %v1085 = vsel %vm1081, %v1069, %v1084
    %v1086 = vsel %vm1080, %v1083, %v1085
    %v1087 = vsel %vm1079, %v1066, %v1069
    %v1088 = vsel %vm1082, %v1075, 920167782
    %v1089 = vsel %vm1081, %v1072, %v1088
    %v1090 = vsel %vm1080, %v1087, %v1089
    %v1091 = vsel %vm1079, %v1069, %v1072
    %v1092 = vsel %vm1082, %v1078, 1326507024
    %v1093 = vsel %vm1081, %v1075, %v1092
    %v1094 = vsel %vm1080, %v1091, %v1093
    %v1095 = vshll.u32 %v1055, 8
    %v1096 = vmul.u32.u64.compose %v1095, %v1094
    %v1097 = vextract.low.u32 %v1096
    %v1098 = vextract.high.u32 %v1096
    %v1099 = vmul.u32.u64.compose %v1095, %v1090
    %v1100 = vextract.low.u32 %v1099
    %v1101 = vextract.high.u32 %v1099
    %v1102 = vmul.u32 %v1095, %v1086
    %v1103 = vadd.s32 %v1098, %v1100
    %vm1104 = vc.u32 %v1098, %v1100
    %v1105 = vadd.s32 %v1101, 1
    %v1106 = vsel %vm1104, %v1105, %v1101
    %v1107 = vadd.s32 %v1102, %v1106
    %v1108 = vadd.s32 %v1107, 536870912
    %v1109 = vshrl.u32 %v1108, 30
    %v1110 = vshll.u32 %v1109, 30
    %v1111 = vsub.s32 %v1107, %v1110
    %vm1112 = vcmp.lt.s32.totalorder %v1111, 0
    %v1113 = vsub.s32 0, %v1111
    %v1114 = vsel %vm1112, %v1113, %v1111
    %v1115 = vclz %v1114
    %v1116 = vsub.s32 %v1115, 2
    %vm1117 = vcmp.gt.s32.totalorder 0, %v1116
    %v1118 = vsel %vm1117, 0, %v1116
    %v1119 = vsub.s32 32, %v1118
    %v1120 = vshll.u32 %v1111, %v1118
    %v1121 = vshrl.u32 %v1103, %v1119
    %v1122 = vor.u32 %v1120, %v1121
    %v1123 = vsub.s32 4294967266, %v1118
    %v1124 = vadd.s32 %v1123, 127
    %v1125 = vshll.u32 %v1124, 23
    %v1126 = vor.u32 4788187, %v1125
    %v1127 = vand.u32 2147483647, %v1126
    %v1129 = vcvt.s32.f32 %v1122
    %v1130 = vmul.f32 %v1129, %v1127
    %v1131 = vxor.u32 %v1130, 2147483648
    %v1132 = vsel %vm1049, %v1131, %v1130
    %v1133 = vsub.s32 4, %v1109
    %v1134 = vsel %vm1049, %v1133, %v1109
    %v1135 = vsel %vm1048, %v1046, %v1132
    %v1136 = vsel %vm1048, 0, %v1134
    %v1137 = vcosq.f32.pop %v1135
    %v1138 = vsinq.f32.pop %v1135
    %vm1139 = vweird.f32 %v1046
    %v1140 = vadd.s32 %v1136, 3
    %v1141 = vand.u32 %v1140, 3
    %vm1142 = vcmp.lt.s32.totalorder %v1141, 2
    %vm1143 = vcmp.eq.s32.totalorder %v1141, 0
    %v1144 = vxor.u32 %v1138, 2147483648
    %v1145 = vsel %vm1143, %v1137, %v1144
    %vm1146 = vcmp.eq.s32.totalorder %v1141, 2
    %v1147 = vxor.u32 %v1137, 2147483648
    %v1148 = vsel %vm1146, %v1147, %v1138
    %v1149 = vsel %vm1142, %v1145, %v1148
    %v1150 = vsel %vm1139, nan, %v1149
    %v1152 = vcombine.high %v1150, %v1150
    %v1153 = vrot.slane %v1150, 2
    %v1154 = vrot.slane %v1152, 2
    %1157 = vst [vmem:[#allocation5 + $0x30] sm:$0xc0] %v1153
    %1158 = vst [vmem:[#allocation5 + $0x38] sm:$0xc0] %v1154
    %1159 = vst [vmem:[#allocation5 + $0x40] sm:$0x1] %v1153
    %1160 = vst [vmem:[#allocation5 + $0x48] sm:$0x1] %v1154
    %v1161 = vmul.f32 %v21, 32.0
    %v1162 = vadd.f32 %v1161, 0.0
    %v1163 = vand.u32 2147483647, %v1162
    %vm1164 = vcmp.le.f32.partialorder %v1163, 0.7853982
    %vm1165 = vcmp.lt.s32.totalorder %v1162, 0
    %v1166 = vand.u32 %v1162, 2139095040
    %v1167 = vshrl.u32 %v1166, 23
    %v1168 = vsub.s32 %v1167, 127
    %v1169 = vand.u32 2147483647, %v1162
    %v1170 = vand.u32 %v1169, 8388607
    %v1171 = vor.u32 %v1170, 8388608
    %v1172 = vsub.s32 0, %v1171
    %v1173 = vadd.s32 %v1168, 1
    %vm1174 = vcmp.gt.s32.totalorder %v1173, 0
    %v1175 = vsel %vm1174, %v1173, 0
    %v1176 = vshrl.u32 %v1175, 5
    %v1177 = vand.u32 %v1175, 31
    %v1178 = vsub.s32 32, %v1177
    %v1179 = vshrl.u32 683565275, %v1178
    %v1180 = vshll.u32 683565275, %v1177
    %v1181 = vshrl.u32 2475754826, %v1178
    %v1182 = vor.u32 %v1180, %v1181
    %v1183 = vshll.u32 2475754826, %v1177
    %v1184 = vshrl.u32 2131351028, %v1178
    %v1185 = vor.u32 %v1183, %v1184
    %v1186 = vshll.u32 2131351028, %v1177
    %v1187 = vshrl.u32 2102212464, %v1178
    %v1188 = vor.u32 %v1186, %v1187
    %v1189 = vshll.u32 2102212464, %v1177
    %v1190 = vshrl.u32 920167782, %v1178
    %v1191 = vor.u32 %v1189, %v1190
    %v1192 = vshll.u32 920167782, %v1177
    %v1193 = vshrl.u32 1326507024, %v1178
    %v1194 = vor.u32 %v1192, %v1193
    %vm1195 = vcmp.lt.s32.totalorder %v1176, 1
    %vm1196 = vcmp.lt.s32.totalorder %v1176, 2
    %vm1197 = vcmp.lt.s32.totalorder %v1176, 3
    %vm1198 = vcmp.lt.s32.totalorder %v1176, 4
    %v1199 = vsel %vm1195, %v1179, %v1182
    %v1200 = vsel %vm1198, %v1188, 2102212464
    %v1201 = vsel %vm1197, %v1185, %v1200
    %v1202 = vsel %vm1196, %v1199, %v1201
    %v1203 = vsel %vm1195, %v1182, %v1185
    %v1204 = vsel %vm1198, %v1191, 920167782
    %v1205 = vsel %vm1197, %v1188, %v1204
    %v1206 = vsel %vm1196, %v1203, %v1205
    %v1207 = vsel %vm1195, %v1185, %v1188
    %v1208 = vsel %vm1198, %v1194, 1326507024
    %v1209 = vsel %vm1197, %v1191, %v1208
    %v1210 = vsel %vm1196, %v1207, %v1209
    %v1211 = vshll.u32 %v1171, 8
    %v1212 = vmul.u32.u64.compose %v1211, %v1210
    %v1213 = vextract.low.u32 %v1212
    %v1214 = vextract.high.u32 %v1212
    %v1215 = vmul.u32.u64.compose %v1211, %v1206
    %v1216 = vextract.low.u32 %v1215
    %v1217 = vextract.high.u32 %v1215
    %v1218 = vmul.u32 %v1211, %v1202
    %v1219 = vadd.s32 %v1214, %v1216
    %vm1220 = vc.u32 %v1214, %v1216
    %v1221 = vadd.s32 %v1217, 1
    %v1222 = vsel %vm1220, %v1221, %v1217
    %v1223 = vadd.s32 %v1218, %v1222
    %v1224 = vadd.s32 %v1223, 536870912
    %v1225 = vshrl.u32 %v1224, 30
    %v1226 = vshll.u32 %v1225, 30
    %v1227 = vsub.s32 %v1223, %v1226
    %vm1228 = vcmp.lt.s32.totalorder %v1227, 0
    %v1229 = vsub.s32 0, %v1227
    %v1230 = vsel %vm1228, %v1229, %v1227
    %v1231 = vclz %v1230
    %v1232 = vsub.s32 %v1231, 2
    %vm1233 = vcmp.gt.s32.totalorder 0, %v1232
    %v1234 = vsel %vm1233, 0, %v1232
    %v1235 = vsub.s32 32, %v1234
    %v1236 = vshll.u32 %v1227, %v1234
    %v1237 = vshrl.u32 %v1219, %v1235
    %v1238 = vor.u32 %v1236, %v1237
    %v1239 = vsub.s32 4294967266, %v1234
    %v1240 = vadd.s32 %v1239, 127
    %v1241 = vshll.u32 %v1240, 23
    %v1242 = vor.u32 4788187, %v1241
    %v1243 = vand.u32 2147483647, %v1242
    %v1245 = vcvt.s32.f32 %v1238
    %v1246 = vmul.f32 %v1245, %v1243
    %v1247 = vxor.u32 %v1246, 2147483648
    %v1248 = vsel %vm1165, %v1247, %v1246
    %v1249 = vsub.s32 4, %v1225
    %v1250 = vsel %vm1165, %v1249, %v1225
    %v1251 = vsel %vm1164, %v1162, %v1248
    %v1252 = vsel %vm1164, 0, %v1250
    %v1253 = vcosq.f32.pop %v1251
    %v1254 = vsinq.f32.pop %v1251
    %vm1255 = vweird.f32 %v1162
    %v1256 = vadd.s32 %v1252, 3
    %v1257 = vand.u32 %v1256, 3
    %vm1258 = vcmp.lt.s32.totalorder %v1257, 2
    %vm1259 = vcmp.eq.s32.totalorder %v1257, 0
    %v1260 = vxor.u32 %v1254, 2147483648
    %v1261 = vsel %vm1259, %v1253, %v1260
    %vm1262 = vcmp.eq.s32.totalorder %v1257, 2
    %v1263 = vxor.u32 %v1253, 2147483648
    %v1264 = vsel %vm1262, %v1263, %v1254
    %v1265 = vsel %vm1258, %v1261, %v1264
    %v1266 = vsel %vm1255, nan, %v1265
    %v1268 = vcombine.high %v1266, %v1266
    %v1269 = vrot.slane %v1266, 7
    %v1270 = vrot.slane %v1268, 7
    %1273 = vst [vmem:[#allocation5 + $0x40] sm:$0xe] %v1269
    %1274 = vst [vmem:[#allocation5 + $0x48] sm:$0xe] %v1270
    %v1275 = vadd.f32 %v1161, 1.5707964
    %v1276 = vand.u32 2147483647, %v1275
    %vm1277 = vcmp.le.f32.partialorder %v1276, 0.7853982
    %vm1278 = vcmp.lt.s32.totalorder %v1275, 0
    %v1279 = vand.u32 %v1275, 2139095040
    %v1280 = vshrl.u32 %v1279, 23
    %v1281 = vsub.s32 %v1280, 127
    %v1282 = vand.u32 2147483647, %v1275
    %v1283 = vand.u32 %v1282, 8388607
    %v1284 = vor.u32 %v1283, 8388608
    %v1285 = vsub.s32 0, %v1284
    %v1286 = vadd.s32 %v1281, 1
    %vm1287 = vcmp.gt.s32.totalorder %v1286, 0
    %v1288 = vsel %vm1287, %v1286, 0
    %v1289 = vshrl.u32 %v1288, 5
    %v1290 = vand.u32 %v1288, 31
    %v1291 = vsub.s32 32, %v1290
    %v1292 = vshrl.u32 683565275, %v1291
    %v1293 = vshll.u32 683565275, %v1290
    %v1294 = vshrl.u32 2475754826, %v1291
    %v1295 = vor.u32 %v1293, %v1294
    %v1296 = vshll.u32 2475754826, %v1290
    %v1297 = vshrl.u32 2131351028, %v1291
    %v1298 = vor.u32 %v1296, %v1297
    %v1299 = vshll.u32 2131351028, %v1290
    %v1300 = vshrl.u32 2102212464, %v1291
    %v1301 = vor.u32 %v1299, %v1300
    %v1302 = vshll.u32 2102212464, %v1290
    %v1303 = vshrl.u32 920167782, %v1291
    %v1304 = vor.u32 %v1302, %v1303
    %v1305 = vshll.u32 920167782, %v1290
    %v1306 = vshrl.u32 1326507024, %v1291
    %v1307 = vor.u32 %v1305, %v1306
    %vm1308 = vcmp.lt.s32.totalorder %v1289, 1
    %vm1309 = vcmp.lt.s32.totalorder %v1289, 2
    %vm1310 = vcmp.lt.s32.totalorder %v1289, 3
    %vm1311 = vcmp.lt.s32.totalorder %v1289, 4
    %v1312 = vsel %vm1308, %v1292, %v1295
    %v1313 = vsel %vm1311, %v1301, 2102212464
    %v1314 = vsel %vm1310, %v1298, %v1313
    %v1315 = vsel %vm1309, %v1312, %v1314
    %v1316 = vsel %vm1308, %v1295, %v1298
    %v1317 = vsel %vm1311, %v1304, 920167782
    %v1318 = vsel %vm1310, %v1301, %v1317
    %v1319 = vsel %vm1309, %v1316, %v1318
    %v1320 = vsel %vm1308, %v1298, %v1301
    %v1321 = vsel %vm1311, %v1307, 1326507024
    %v1322 = vsel %vm1310, %v1304, %v1321
    %v1323 = vsel %vm1309, %v1320, %v1322
    %v1324 = vshll.u32 %v1284, 8
    %v1325 = vmul.u32.u64.compose %v1324, %v1323
    %v1326 = vextract.low.u32 %v1325
    %v1327 = vextract.high.u32 %v1325
    %v1328 = vmul.u32.u64.compose %v1324, %v1319
    %v1329 = vextract.low.u32 %v1328
    %v1330 = vextract.high.u32 %v1328
    %v1331 = vmul.u32 %v1324, %v1315
    %v1332 = vadd.s32 %v1327, %v1329
    %vm1333 = vc.u32 %v1327, %v1329
    %v1334 = vadd.s32 %v1330, 1
    %v1335 = vsel %vm1333, %v1334, %v1330
    %v1336 = vadd.s32 %v1331, %v1335
    %v1337 = vadd.s32 %v1336, 536870912
    %v1338 = vshrl.u32 %v1337, 30
    %v1339 = vshll.u32 %v1338, 30
    %v1340 = vsub.s32 %v1336, %v1339
    %vm1341 = vcmp.lt.s32.totalorder %v1340, 0
    %v1342 = vsub.s32 0, %v1340
    %v1343 = vsel %vm1341, %v1342, %v1340
    %v1344 = vclz %v1343
    %v1345 = vsub.s32 %v1344, 2
    %vm1346 = vcmp.gt.s32.totalorder 0, %v1345
    %v1347 = vsel %vm1346, 0, %v1345
    %v1348 = vsub.s32 32, %v1347
    %v1349 = vshll.u32 %v1340, %v1347
    %v1350 = vshrl.u32 %v1332, %v1348
    %v1351 = vor.u32 %v1349, %v1350
    %v1352 = vsub.s32 4294967266, %v1347
    %v1353 = vadd.s32 %v1352, 127
    %v1354 = vshll.u32 %v1353, 23
    %v1355 = vor.u32 4788187, %v1354
    %v1356 = vand.u32 2147483647, %v1355
    %v1358 = vcvt.s32.f32 %v1351
    %v1359 = vmul.f32 %v1358, %v1356
    %v1360 = vxor.u32 %v1359, 2147483648
    %v1361 = vsel %vm1278, %v1360, %v1359
    %v1362 = vsub.s32 4, %v1338
    %v1363 = vsel %vm1278, %v1362, %v1338
    %v1364 = vsel %vm1277, %v1275, %v1361
    %v1365 = vsel %vm1277, 0, %v1363
    %v1366 = vcosq.f32.pop %v1364
    %v1367 = vsinq.f32.pop %v1364
    %vm1368 = vweird.f32 %v1275
    %v1369 = vadd.s32 %v1365, 3
    %v1370 = vand.u32 %v1369, 3
    %vm1371 = vcmp.lt.s32.totalorder %v1370, 2
    %vm1372 = vcmp.eq.s32.totalorder %v1370, 0
    %v1373 = vxor.u32 %v1367, 2147483648
    %v1374 = vsel %vm1372, %v1366, %v1373
    %vm1375 = vcmp.eq.s32.totalorder %v1370, 2
    %v1376 = vxor.u32 %v1366, 2147483648
    %v1377 = vsel %vm1375, %v1376, %v1367
    %v1378 = vsel %vm1371, %v1374, %v1377
    %v1379 = vsel %vm1368, nan, %v1378
    %v1381 = vcombine.low %v1379, %v1379
    %1383 = vst [vmem:[#allocation5 + $0x40] sm:$0x70] %v1381
    %1384 = vst [vmem:[#allocation5 + $0x48] sm:$0x70] %v1379
    // Predicated region
    $region10: #{tpu_custom_call.1} parent=1 // pred_check
      _
    $region11: #{tpu_custom_call.1} parent=1 // pred_check_branch
      %1386 = sbr.rel (0) target = $region13
    $region12: #{tpu_custom_call.1} parent=1 // pred_region
      %s1388 = ssub.s32 1280, 1280
      %1389 = vsyncadd [#allocation4], %s1388
      %s1390 = sshll.u32 [#allocation5], 4
      %s1391 = int_to_ptr.vmem [resolvable:$true] %s1390
      %1396 = dma.vmem_to_hbm [thread:$0]  %s1391, 1280, %s1, [#allocation4], 256, 256, 16
    $region13: #{tpu_custom_call.1} parent=1 // pred_fallthru
      _
    // Predicated region
    $region14: #{tpu_custom_call.1} parent=1 // pred_check
      _
    $region15: #{tpu_custom_call.1} parent=1 // pred_check_branch
      %1398 = sbr.rel (0) target = $region17
    $region16: #{tpu_custom_call.1} parent=1 // pred_region
      %1399 = dma.done [#allocation4], 1280
    $region17: #{tpu_custom_call.1} parent=1 // pred_fallthru
      _
    %1400 = vsyncpa [#allocation3], 1
    %1401 = vsyncpa [#allocation4], 1

</llo_original>
